<compile_context>
chip_gen: v7x
topology: tpu7x:2x2x1
jax: 0.10.0
libtpu: 0.0.40
codegen_flags: <defaults>
</compile_context>

<pallas_src>
import math

import jax
import jax.numpy as jnp
from jax.experimental import pallas as pl
from jax.experimental.pallas import tpu as pltpu

# bf16 weights/state on the MXU (f32 accumulation).  Set to False for exact
# float32 parity with the PyTorch module.
USE_BF16 = True


def _round_up(x, m):
    return ((x + m - 1) // m) * m


def make_critic_kernel(Dp, Hp, Qp, compute_dtype):
    """Fused twin-Q kernel for static dims.

    Packed weight buffer (rows, all sections 8-aligned, Hp lanes, Hp >= 128):
      [0       : Dp      )  W1  = [W1a | W1b]            cols [0:2H) real
      [Dp      : Dp+Hp   )  W2  = blockdiag(W2a, W2b)    cols [0:2H) real
      [Dp+Hp   : Dp+2*Hp )  W3  = blockdiag(w3a, w3b)    cols {0,1}  real
    Bias buffer rows: 0 -> b1, 1 -> b2, 2 -> b3 (f32, zero padded).
    """

    def kernel(x_ref, w_ref, b_ref, o_ref):
        x = x_ref[...].astype(compute_dtype)                          # (TB, Dp)
        # Layer 1: padded cols of x hit zero rows of W1 -> contribute exact 0.
        h = jnp.dot(x, w_ref[0:Dp, :],
                    preferred_element_type=jnp.float32) + b_ref[0:1, :]
        h = jnp.maximum(h, 0.0)                                       # ReLU, f32
        # Layer 2: padded hidden lanes stay exactly 0 through the zero blocks.
        h = jnp.dot(h.astype(compute_dtype), w_ref[Dp:Dp + Hp, :],
                    preferred_element_type=jnp.float32) + b_ref[1:2, :]
        h = jnp.maximum(h, 0.0)                                       # ReLU, f32
        # Layer 3: lane-dense (TB, 128) output; cols 0/1 = q1/q2, rest 0.
        q = jnp.dot(h.astype(compute_dtype), w_ref[Dp + Hp:Dp + 2 * Hp, 0:Qp],
                    preferred_element_type=jnp.float32) + b_ref[2:3, 0:Qp]
        o_ref[...] = q.astype(o_ref.dtype)

    return kernel


def pack_critic_params(params1, params2, use_bf16=USE_BF16):
    """Merge the twin Q-nets into one padded weight buffer + one bias buffer."""
    w1a, b1a, w2a, b2a, w3a, b3a = params1
    w1b, b1b, w2b, b2b, w3b, b3b = params2
    D, H = w1a.shape
    H2 = 2 * H
    Dp = _round_up(D, 8)                        # 8-aligned W1 row section
    Hp = max(128, _round_up(H2, 128))           # lane-dense hidden width

    W = jnp.zeros((Dp + 2 * Hp, Hp), jnp.float32)
    # W1: concat of both first layers.
    W = W.at[0:D, 0:H].set(w1a).at[0:D, H:H2].set(w1b)
    # W2: block-diagonal.
    W = W.at[Dp:Dp + H, 0:H].set(w2a)
    W = W.at[Dp + H:Dp + H2, H:H2].set(w2b)
    # W3: block-diagonal into output columns 0 / 1.
    W = W.at[Dp + Hp:Dp + Hp + H, 0:1].set(w3a)
    W = W.at[Dp + Hp + H:Dp + Hp + H2, 1:2].set(w3b)
    W = W.astype(jnp.bfloat16 if use_bf16 else jnp.float32)

    Bb = jnp.zeros((8, Hp), jnp.float32)        # one (8, Hp) f32 tile of biases
    Bb = Bb.at[0, 0:H].set(b1a[0]).at[0, H:H2].set(b1b[0])
    Bb = Bb.at[1, 0:H].set(b2a[0]).at[1, H:H2].set(b2b[0])
    Bb = Bb.at[2, 0].set(b3a[0, 0]).at[2, 1].set(b3b[0, 0])
    return W, Bb


@jax.jit
def critic_forward(state, w_packed, b_packed):
    """Equivalent of Critic.forward: returns (q1, q2), each (B, 1) float32."""
    B, D = state.shape
    Rw, Hp = w_packed.shape
    Dp = Rw - 2 * Hp
    Qp = 128

    # Zero-pad the feature dim to the packed W1 section width (exact: the
    # padded rows of W1 are zeros).  Pure layout plumbing, tiny.
    state_p = jnp.pad(state, ((0, 0), (0, Dp - D))) if Dp > D else state

    # Batch tiling: degenerate single step at small B; shards large training
    # batches across TensorCores (v7x megacore) and bounds activation VMEM.
    TB = 256 if (B > 256 and B % 256 == 0) else B
    grid = (B // TB,)

    kernel = make_critic_kernel(Dp, Hp, Qp, w_packed.dtype)

    # Advisory cost hint (all ints — previous version crashed on float flops).
    flops = int(2 * B * (Dp * Hp + Hp * Hp + Hp * Qp))
    bytes_accessed = int(
        state_p.size * state_p.dtype.itemsize
        + w_packed.size * w_packed.dtype.itemsize
        + b_packed.size * b_packed.dtype.itemsize
        + B * Qp * 4
    )

    q = pl.pallas_call(
        kernel,
        out_shape=jax.ShapeDtypeStruct((B, Qp), jnp.float32),
        grid=grid,
        in_specs=[
            pl.BlockSpec((TB, Dp), lambda i: (i, 0)),    # state tile
            pl.BlockSpec((Rw, Hp), lambda i: (0, 0)),    # packed weights (whole)
            pl.BlockSpec((8, Hp), lambda i: (0, 0)),     # packed biases (whole)
        ],
        out_specs=pl.BlockSpec((TB, Qp), lambda i: (i, 0)),
        compiler_params=pltpu.CompilerParams(dimension_semantics=("parallel",)),
        cost_estimate=pl.CostEstimate(
            flops=flops, transcendentals=0, bytes_accessed=bytes_accessed
        ),
    )(state_p, w_packed, b_packed)

    # Slice the lane-combined (B, 128) result back into the module's (q1, q2).
    return q[:, 0:1], q[:, 1:2]


def init_linear(key, fan_in, fan_out):
    """PyTorch-style Linear init: U(-1/sqrt(fan_in), 1/sqrt(fan_in)).
    Weight returned as (fan_in, fan_out) — transposed vs. torch's (out, in)."""
    kw, kb = jax.random.split(key)
    bound = 1.0 / math.sqrt(fan_in)
    w = jax.random.uniform(kw, (fan_in, fan_out), jnp.float32, -bound, bound)
    b = jax.random.uniform(kb, (1, fan_out), jnp.float32, -bound, bound)
    return w, b


def init_q_net_params(key, in_dim, hidden):
    k1, k2, k3 = jax.random.split(key, 3)
    w1, b1 = init_linear(k1, in_dim, hidden)
    w2, b2 = init_linear(k2, hidden, hidden)
    w3, b3 = init_linear(k3, hidden, 1)
    return (w1, b1, w2, b2, w3, b3)


def reference_q_net(state, params, compute_dtype=jnp.float32):
    """Pure-JAX reference for one (unmerged) q_net.  With compute_dtype=bf16 it
    mimics the kernel exactly (bf16 matmul inputs, f32 accumulation/bias)."""
    w1, b1, w2, b2, w3, b3 = params

    def q(a):
        return a.astype(compute_dtype).astype(jnp.float32)

    h = jnp.maximum(q(state) @ q(w1) + b1, 0.0)
    h = jnp.maximum(q(h) @ q(w2) + b2, 0.0)
    return q(h) @ q(w3) + b3


if __name__ == "__main__":
    # Small shapes consistent with the module (HalfCheetah-ish dims, small hidden).
    batch = 8
    state_dim = 17
    action_dim = 6
    n_hidden_nodes = 32
    in_dim = state_dim + action_dim  # Critic consumes concat(state, action)

    key = jax.random.PRNGKey(0)
    k_x, k_p1, k_p2 = jax.random.split(key, 3)

    state = jax.random.normal(k_x, (batch, in_dim), jnp.float32)
    params1 = init_q_net_params(k_p1, in_dim, n_hidden_nodes)
    params2 = init_q_net_params(k_p2, in_dim, n_hidden_nodes)

    # Pack the twin networks once on the host; the kernel sees 3 fused matmuls
    # fed by a single weight buffer + a single bias tile.
    w_packed, b_packed = pack_critic_params(params1, params2)

    q1, q2 = critic_forward(state, w_packed, b_packed)
    q1 = jax.block_until_ready(q1)
    q2 = jax.block_until_ready(q2)
    assert q1.shape == (batch, 1) and q2.shape == (batch, 1)

    # Strict check against a reference that uses the same bf16-in/f32-accumulate
    # recipe as the kernel.
    cd = jnp.bfloat16 if USE_BF16 else jnp.float32
    ref1 = reference_q_net(state, params1, cd)
    ref2 = reference_q_net(state, params2, cd)
    assert jnp.allclose(q1, ref1, atol=1e-4, rtol=1e-4)
    assert jnp.allclose(q2, ref2, atol=1e-4, rtol=1e-4)

    # Loose sanity check against the full float32 reference (only bf16 weight
    # quantization drift separates them).
    ref1_f32 = reference_q_net(state, params1)
    ref2_f32 = reference_q_net(state, params2)
    assert jnp.allclose(q1, ref1_f32, atol=5e-2, rtol=5e-2)
    assert jnp.allclose(q2, ref2_f32, atol=5e-2, rtol=5e-2)

    print("KERNEL_OK")
</pallas_src>

<mosaic_0001>
module attributes {stable_mosaic.version = 11 : i64} {
  func.func @kernel(%arg0: i32, %arg1: memref<8x24xf32, #tpu.memory_space<vmem>>, %arg2: memref<280x128xbf16, #tpu.memory_space<vmem>>, %arg3: memref<8x128xf32, #tpu.memory_space<vmem>>, %arg4: memref<8x128xf32, #tpu.memory_space<vmem>>) attributes {dimension_semantics = [#tpu.dimension_semantics<parallel>], iteration_bounds = array<i64: 1>, scalar_prefetch = 0 : i64, scratch_operands = 0 : i64, tpu.core_type = #tpu.core_type<tc>, window_params = [{transform_indices = @transform_0, window_bounds = array<i64: 8, 24>}, {pipeline_mode = #tpu.pipeline_mode<synchronous>, transform_indices = @transform_1, window_bounds = array<i64: 280, 128>}, {pipeline_mode = #tpu.pipeline_mode<synchronous>, transform_indices = @transform_2, window_bounds = array<i64: 8, 128>}, {transform_indices = @transform_3, window_bounds = array<i64: 8, 128>}]} {
    %c0 = arith.constant 0 : index
    %c0_0 = arith.constant 0 : index
    %0 = vector.load %arg1[%c0, %c0_0] : memref<8x24xf32, #tpu.memory_space<vmem>>, vector<8x24xf32>
    %1 = arith.truncf %0 : vector<8x24xf32> to vector<8x24xbf16>
    %c0_1 = arith.constant 0 : index
    %c0_2 = arith.constant 0 : index
    %2 = vector.load %arg2[%c0_1, %c0_2] : memref<280x128xbf16, #tpu.memory_space<vmem>>, vector<24x128xbf16>
    %cst = arith.constant dense<0.000000e+00> : vector<8x128xf32>
    %3 = tpu.matmul %1, %2, %cst {dimension_numbers = #tpu.dot_dimension_numbers<[1], [0], [0], [1], [0, 0, 1, 1], [], []>} : vector<8x24xbf16>, vector<24x128xbf16>, vector<8x128xf32> -> vector<8x128xf32>
    %c0_3 = arith.constant 0 : index
    %c0_4 = arith.constant 0 : index
    %4 = vector.load %arg3[%c0_3, %c0_4] : memref<8x128xf32, #tpu.memory_space<vmem>>, vector<1x128xf32>
    %5 = vector.broadcast %4 : vector<1x128xf32> to vector<8x128xf32>
    %6 = arith.addf %3, %5 : vector<8x128xf32>
    %cst_5 = arith.constant 0.000000e+00 : f32
    %7 = vector.broadcast %cst_5 : f32 to vector<8x128xf32>
    %8 = arith.maximumf %6, %7 : vector<8x128xf32>
    %9 = arith.truncf %8 : vector<8x128xf32> to vector<8x128xbf16>
    %c24 = arith.constant 24 : index
    %c0_6 = arith.constant 0 : index
    %10 = vector.load %arg2[%c24, %c0_6] : memref<280x128xbf16, #tpu.memory_space<vmem>>, vector<128x128xbf16>
    %cst_7 = arith.constant dense<0.000000e+00> : vector<8x128xf32>
    %11 = tpu.matmul %9, %10, %cst_7 {dimension_numbers = #tpu.dot_dimension_numbers<[1], [0], [0], [1], [0, 0, 1, 1], [], []>} : vector<8x128xbf16>, vector<128x128xbf16>, vector<8x128xf32> -> vector<8x128xf32>
    %c1 = arith.constant 1 : index
    %c0_8 = arith.constant 0 : index
    %12 = vector.load %arg3[%c1, %c0_8] : memref<8x128xf32, #tpu.memory_space<vmem>>, vector<1x128xf32>
    %13 = vector.broadcast %12 : vector<1x128xf32> to vector<8x128xf32>
    %14 = arith.addf %11, %13 : vector<8x128xf32>
    %cst_9 = arith.constant 0.000000e+00 : f32
    %15 = vector.broadcast %cst_9 : f32 to vector<8x128xf32>
    %16 = arith.maximumf %14, %15 : vector<8x128xf32>
    %17 = arith.truncf %16 : vector<8x128xf32> to vector<8x128xbf16>
    %c152 = arith.constant 152 : index
    %c0_10 = arith.constant 0 : index
    %18 = vector.load %arg2[%c152, %c0_10] : memref<280x128xbf16, #tpu.memory_space<vmem>>, vector<128x128xbf16>
    %cst_11 = arith.constant dense<0.000000e+00> : vector<8x128xf32>
    %19 = tpu.matmul %17, %18, %cst_11 {dimension_numbers = #tpu.dot_dimension_numbers<[1], [0], [0], [1], [0, 0, 1, 1], [], []>} : vector<8x128xbf16>, vector<128x128xbf16>, vector<8x128xf32> -> vector<8x128xf32>
    %c2 = arith.constant 2 : index
    %c0_12 = arith.constant 0 : index
    %20 = vector.load %arg3[%c2, %c0_12] : memref<8x128xf32, #tpu.memory_space<vmem>>, vector<1x128xf32>
    %21 = vector.broadcast %20 : vector<1x128xf32> to vector<8x128xf32>
    %22 = arith.addf %19, %21 : vector<8x128xf32>
    %c0_13 = arith.constant 0 : index
    %c0_14 = arith.constant 0 : index
    %23 = vector.load %arg4[%c0_13, %c0_14] : memref<8x128xf32, #tpu.memory_space<vmem>>, vector<8x128xf32>
    tpu.vector_store %arg4[%c0_13, %c0_14], %22 {strides = array<i32>} : memref<8x128xf32, #tpu.memory_space<vmem>>, vector<8x128xf32>,
    return
  }
  func.func @transform_0(%arg0: i32) -> (i32, i32) {
    %c0_i32 = arith.constant 0 : i32
    %c0_i32_0 = arith.constant 0 : i32
    return %arg0, %c0_i32 : i32, i32
  }
  func.func @transform_1(%arg0: i32) -> (i32, i32) {
    %c0_i32 = arith.constant 0 : i32
    %c0_i32_0 = arith.constant 0 : i32
    %c0_i32_1 = arith.constant 0 : i32
    return %c0_i32, %c0_i32_0 : i32, i32
  }
  func.func @transform_2(%arg0: i32) -> (i32, i32) {
    %c0_i32 = arith.constant 0 : i32
    %c0_i32_0 = arith.constant 0 : i32
    %c0_i32_1 = arith.constant 0 : i32
    return %c0_i32, %c0_i32_0 : i32, i32
  }
  func.func @transform_3(%arg0: i32) -> (i32, i32) {
    %c0_i32 = arith.constant 0 : i32
    %c0_i32_0 = arith.constant 0 : i32
    return %arg0, %c0_i32 : i32, i32
  }
}

</mosaic_0001>

<llo_original>
// kernel: critic_forward.1
$region0: #{critic_forward.1}
  #allocation0 [shape = 'u32[]', space=smem, size = 0x4, offset = 0x4, fixed_abs, tag = 'smem constant byte address 0x4 - core index']
  #allocation1 [shape = 'u32[144,128]{1,0:T(1,128)}', space=vmem, size = 0x12000, scoped, tag = 'internal scratch']
  %s0 = inlined_call_operand.vmem [shape: f32[8,24], index: 0, kind: input, shape index: {}]
  %s1 = inlined_call_operand.hbm [shape: bf16[280,128], index: 1, kind: input, shape index: {}]
  %s2 = inlined_call_operand.vmem [shape: f32[8,128], index: 2, kind: input, shape index: {}]
  %s3 = inlined_call_operand.vmem [shape: f32[8,128], index: 3, kind: output, shape index: {}]
  %s4 = sld [smem:[#allocation0]]
  $region26: #{critic_forward.1} parent=0
    _
  %s6 = ssub.s32 1, %s4
  %s7 = scalar_select 0, %s6, %s4
  $region1: #{critic_forward.1} parent=0
    #allocation2 [shape = 'u8[71680]{0}', space=vmem, size = 0x11800, scoped, tag = 'input window, operand 1, single buffered']
    #allocation3 [shape = 's32[1]{0}', space=sflag, size = 0x4, scoped, tag = 'scoped memory for critic_forward.1']
    %8 = vsyncpa [#allocation3], 0
    // Predicated region
    $region2: #{critic_forward.1} parent=1 // pred_check
      _
    $region3: #{critic_forward.1} parent=1 // pred_check_branch
      %10 = sbr.rel (0) target = $region5
    $region4: #{critic_forward.1} parent=1 // pred_region
      _
    $region5: #{critic_forward.1} parent=1 // pred_fallthru
      _
    // Predicated region
    $region6: #{critic_forward.1} parent=1 // pred_check
      _
    $region7: #{critic_forward.1} parent=1 // pred_check_branch
      %12 = sbr.rel (0) target = $region9
    $region8: #{critic_forward.1} parent=1 // pred_region
      %s14 = ssub.s32 2240, 2240
      %15 = vsyncadd [#allocation3], %s14
      %s16 = sshll.u32 [#allocation2], 4
      %s17 = int_to_ptr.vmem [resolvable:$true] %s16
      %22 = dma.hbm_to_vmem [thread:$0]  %s1, 2240, %s17, [#allocation3], 64, 64, 4
    $region9: #{critic_forward.1} parent=1 // pred_fallthru
      _
    // Predicated region
    $region10: #{critic_forward.1} parent=1 // pred_check
      _
    $region11: #{critic_forward.1} parent=1 // pred_check_branch
      %24 = sbr.rel (0) target = $region13
    $region12: #{critic_forward.1} parent=1 // pred_region
      _
    $region13: #{critic_forward.1} parent=1 // pred_fallthru
      _
    // Predicated region
    $region14: #{critic_forward.1} parent=1 // pred_check
      _
    $region15: #{critic_forward.1} parent=1 // pred_check_branch
      %26 = sbr.rel (0) target = $region17
    $region16: #{critic_forward.1} parent=1 // pred_region
      %27 = dma.done [#allocation3], 2240
    $region17: #{critic_forward.1} parent=1 // pred_fallthru
      _
    %v29 = vld [vmem:[%s0] sm:$0xff]
    %v30 = vpack.c.bf16 %v29, %v29
    %v31 = vld [vmem:[#allocation2] sm:$0xf]
    %v32 = vld [vmem:[#allocation2 + $0x4] sm:$0xf]
    %v33 = vld [vmem:[#allocation2 + $0x8] sm:$0xf]
    %v34 = vld [vmem:[%s2] sm:$0x1]
    %v35 = vlaneseq
    %v36 = vshrl.u32 %v35, 7
    %v37 = vsub.s32 0, %v36
    %v38 = vrot.slane %v34, %v37
    %v42 = vunpack.c.l.b16 %v31
    %v43 = vunpack.c.l.b16 %v32
    %v44 = vunpack.c.l.b16 %v33
    %v45 = vpack.c.b16 %v43, %v42
    %v46 = vpack.c.b16 %v44, %v44
    %vm48 = vcmask 195584
    %v50 = vsel %vm48, %v30, 0
    %vm52 = vcmask 1043456
    %v54 = vsel %vm52, %v46, 0
    %56 = vmatprep.subr.bf16.mxu0 0
    %57 = vmatpush1.bf16.msra.mxu0 %v45
    %58 = vmatprep.subr.bf16.mxu0 0
    %59 = vmatpush1.bf16.msra.mxu0 %v54
    %60 = vmatprep.subr.bf16.mxu0 0
    %61 = vmatpush1.bf16.msra.mxu0 0
    %62 = vmatprep.subr.bf16.mxu0 0
    %63 = vmatpush1.bf16.msra.mxu0 0
    %64 = vmatprep.subr.bf16.mxu0 0
    %65 = vmatpush1.bf16.msra.mxu0 0
    %66 = vmatprep.subr.bf16.mxu0 0
    %67 = vmatpush1.bf16.msra.mxu0 0
    %68 = vmatprep.subr.bf16.mxu0 0
    %69 = vmatpush1.bf16.msra.mxu0 0
    %70 = vmatprep.subr.bf16.mxu0 0
    %71 = vmatpush1.bf16.msra.mxu0 0
    %72 = vmatprep.subr.bf16.mxu0 0
    %73 = vmatpush1.bf16.msra.mxu0 0
    %74 = vmatprep.subr.bf16.mxu0 0
    %75 = vmatpush1.bf16.msra.mxu0 0
    %76 = vmatprep.subr.bf16.mxu0 0
    %77 = vmatpush1.bf16.msra.mxu0 0
    %78 = vmatprep.subr.bf16.mxu0 0
    %79 = vmatpush1.bf16.msra.mxu0 0
    %80 = vmatprep.subr.bf16.mxu0 0
    %81 = vmatpush1.bf16.msra.mxu0 0
    %82 = vmatprep.subr.bf16.mxu0 0
    %83 = vmatpush1.bf16.msra.mxu0 0
    %84 = vmatprep.subr.bf16.mxu0 0
    %85 = vmatpush1.bf16.msra.mxu0 0
    %86 = vmatprep.subr.bf16.mxu0 0
    %87 = vmatpush1.bf16.msra.mxu0 0
    %88 = vmatprep.mubr.bf16.mxu0 0
    %89 = vmatmul.mubr.bf16.gmra.mrb[0].mxu0 %v50
    %v90 = vpop.f32.mrb[0].mxu0
    %v91 = vadd.f32 %v38, %v90
    %v92 = vpop.f32.mrb[0].mxu0
    %v93 = vpop.f32.mrb[0].mxu0
    %v94 = vpop.f32.mrb[0].mxu0
    %95 = vdwg.mxu0
    %v96 = vmax.f32 %v91, 0.0
    %v97 = vpack.c.bf16 %v96, %v96
    %v98 = vld [vmem:[#allocation2 + $0xc] sm:$0xf]
    %v99 = vld [vmem:[#allocation2 + $0x10] sm:$0xf]
    %v100 = vld [vmem:[#allocation2 + $0x14] sm:$0xf]
    %v101 = vld [vmem:[#allocation2 + $0x18] sm:$0xf]
    %v102 = vld [vmem:[#allocation2 + $0x1c] sm:$0xf]
    %v103 = vld [vmem:[#allocation2 + $0x20] sm:$0xf]
    %v104 = vld [vmem:[#allocation2 + $0x24] sm:$0xf]
    %v105 = vld [vmem:[#allocation2 + $0x28] sm:$0xf]
    %v106 = vld [vmem:[#allocation2 + $0x2c] sm:$0xf]
    %v107 = vld [vmem:[#allocation2 + $0x30] sm:$0xf]
    %v108 = vld [vmem:[#allocation2 + $0x34] sm:$0xf]
    %v109 = vld [vmem:[#allocation2 + $0x38] sm:$0xf]
    %v110 = vld [vmem:[#allocation2 + $0x3c] sm:$0xf]
    %v111 = vld [vmem:[#allocation2 + $0x40] sm:$0xf]
    %v112 = vld [vmem:[#allocation2 + $0x44] sm:$0xf]
    %v113 = vld [vmem:[#allocation2 + $0x48] sm:$0xf]
    %v114 = vld [vmem:[%s2 + $0x1] sm:$0x1]
    %v115 = vlaneseq
    %v116 = vshrl.u32 %v115, 7
    %v117 = vsub.s32 0, %v116
    %v118 = vrot.slane %v114, %v117
    %v135 = vunpack.c.l.b16 %v98
    %v136 = vunpack.c.l.b16 %v99
    %v137 = vunpack.c.l.b16 %v100
    %v138 = vunpack.c.l.b16 %v101
    %v139 = vunpack.c.l.b16 %v102
    %v140 = vunpack.c.l.b16 %v103
    %v141 = vunpack.c.l.b16 %v104
    %v142 = vunpack.c.l.b16 %v105
    %v143 = vunpack.c.l.b16 %v106
    %v144 = vunpack.c.l.b16 %v107
    %v145 = vunpack.c.l.b16 %v108
    %v146 = vunpack.c.l.b16 %v109
    %v147 = vunpack.c.l.b16 %v110
    %v148 = vunpack.c.l.b16 %v111
    %v149 = vunpack.c.l.b16 %v112
    %v150 = vunpack.c.l.b16 %v113
    %v151 = vpack.c.b16 %v136, %v135
    %v152 = vpack.c.b16 %v138, %v137
    %v153 = vpack.c.b16 %v140, %v139
    %v154 = vpack.c.b16 %v142, %v141
    %v155 = vpack.c.b16 %v144, %v143
    %v156 = vpack.c.b16 %v146, %v145
    %v157 = vpack.c.b16 %v148, %v147
    %v158 = vpack.c.b16 %v150, %v149
    %167 = vmatprep.subr.bf16.mxu0 0
    %168 = vmatpush1.bf16.msra.mxu0 %v151
    %169 = vmatprep.subr.bf16.mxu0 0
    %170 = vmatpush1.bf16.msra.mxu0 %v152
    %171 = vmatprep.subr.bf16.mxu0 0
    %172 = vmatpush1.bf16.msra.mxu0 %v153
    %173 = vmatprep.subr.bf16.mxu0 0
    %174 = vmatpush1.bf16.msra.mxu0 %v154
    %175 = vmatprep.subr.bf16.mxu0 0
    %176 = vmatpush1.bf16.msra.mxu0 %v155
    %177 = vmatprep.subr.bf16.mxu0 0
    %178 = vmatpush1.bf16.msra.mxu0 %v156
    %179 = vmatprep.subr.bf16.mxu0 0
    %180 = vmatpush1.bf16.msra.mxu0 %v157
    %181 = vmatprep.subr.bf16.mxu0 0
    %182 = vmatpush1.bf16.msra.mxu0 %v158
    %183 = vmatprep.subr.bf16.mxu0 0
    %184 = vmatpush1.bf16.msra.mxu0 0
    %185 = vmatprep.subr.bf16.mxu0 0
    %186 = vmatpush1.bf16.msra.mxu0 0
    %187 = vmatprep.subr.bf16.mxu0 0
    %188 = vmatpush1.bf16.msra.mxu0 0
    %189 = vmatprep.subr.bf16.mxu0 0
    %190 = vmatpush1.bf16.msra.mxu0 0
    %191 = vmatprep.subr.bf16.mxu0 0
    %192 = vmatpush1.bf16.msra.mxu0 0
    %193 = vmatprep.subr.bf16.mxu0 0
    %194 = vmatpush1.bf16.msra.mxu0 0
    %195 = vmatprep.subr.bf16.mxu0 0
    %196 = vmatpush1.bf16.msra.mxu0 0
    %197 = vmatprep.subr.bf16.mxu0 0
    %198 = vmatpush1.bf16.msra.mxu0 0
    %199 = vmatprep.mubr.bf16.mxu0 0
    %200 = vmatmul.mubr.bf16.gmra.mrb[0].mxu0 %v97
    %v201 = vpop.f32.mrb[0].mxu0
    %v202 = vadd.f32 %v118, %v201
    %v203 = vpop.f32.mrb[0].mxu0
    %v204 = vpop.f32.mrb[0].mxu0
    %v205 = vpop.f32.mrb[0].mxu0
    %206 = vdwg.mxu0
    %v207 = vmax.f32 %v202, 0.0
    %v208 = vpack.c.bf16 %v207, %v207
    %v209 = vld [vmem:[#allocation2 + $0x4c] sm:$0xf]
    %v210 = vld [vmem:[#allocation2 + $0x50] sm:$0xf]
    %v211 = vld [vmem:[#allocation2 + $0x54] sm:$0xf]
    %v212 = vld [vmem:[#allocation2 + $0x58] sm:$0xf]
    %v213 = vld [vmem:[#allocation2 + $0x5c] sm:$0xf]
    %v214 = vld [vmem:[#allocation2 + $0x60] sm:$0xf]
    %v215 = vld [vmem:[#allocation2 + $0x64] sm:$0xf]
    %v216 = vld [vmem:[#allocation2 + $0x68] sm:$0xf]
    %v217 = vld [vmem:[#allocation2 + $0x6c] sm:$0xf]
    %v218 = vld [vmem:[#allocation2 + $0x70] sm:$0xf]
    %v219 = vld [vmem:[#allocation2 + $0x74] sm:$0xf]
    %v220 = vld [vmem:[#allocation2 + $0x78] sm:$0xf]
    %v221 = vld [vmem:[#allocation2 + $0x7c] sm:$0xf]
    %v222 = vld [vmem:[#allocation2 + $0x80] sm:$0xf]
    %v223 = vld [vmem:[#allocation2 + $0x84] sm:$0xf]
    %v224 = vld [vmem:[#allocation2 + $0x88] sm:$0xf]
    %v225 = vld [vmem:[%s2 + $0x2] sm:$0x1]
    %v226 = vlaneseq
    %v227 = vshrl.u32 %v226, 7
    %v228 = vsub.s32 0, %v227
    %v229 = vrot.slane %v225, %v228
    %v246 = vunpack.c.l.b16 %v209
    %v247 = vunpack.c.l.b16 %v210
    %v248 = vunpack.c.l.b16 %v211
    %v249 = vunpack.c.l.b16 %v212
    %v250 = vunpack.c.l.b16 %v213
    %v251 = vunpack.c.l.b16 %v214
    %v252 = vunpack.c.l.b16 %v215
    %v253 = vunpack.c.l.b16 %v216
    %v254 = vunpack.c.l.b16 %v217
    %v255 = vunpack.c.l.b16 %v218
    %v256 = vunpack.c.l.b16 %v219
    %v257 = vunpack.c.l.b16 %v220
    %v258 = vunpack.c.l.b16 %v221
    %v259 = vunpack.c.l.b16 %v222
    %v260 = vunpack.c.l.b16 %v223
    %v261 = vunpack.c.l.b16 %v224
    %v262 = vpack.c.b16 %v247, %v246
    %v263 = vpack.c.b16 %v249, %v248
    %v264 = vpack.c.b16 %v251, %v250
    %v265 = vpack.c.b16 %v253, %v252
    %v266 = vpack.c.b16 %v255, %v254
    %v267 = vpack.c.b16 %v257, %v256
    %v268 = vpack.c.b16 %v259, %v258
    %v269 = vpack.c.b16 %v261, %v260
    %278 = vmatprep.subr.bf16.mxu0 0
    %279 = vmatpush1.bf16.msra.mxu0 %v262
    %280 = vmatprep.subr.bf16.mxu0 0
    %281 = vmatpush1.bf16.msra.mxu0 %v263
    %282 = vmatprep.subr.bf16.mxu0 0
    %283 = vmatpush1.bf16.msra.mxu0 %v264
    %284 = vmatprep.subr.bf16.mxu0 0
    %285 = vmatpush1.bf16.msra.mxu0 %v265
    %286 = vmatprep.subr.bf16.mxu0 0
    %287 = vmatpush1.bf16.msra.mxu0 %v266
    %288 = vmatprep.subr.bf16.mxu0 0
    %289 = vmatpush1.bf16.msra.mxu0 %v267
    %290 = vmatprep.subr.bf16.mxu0 0
    %291 = vmatpush1.bf16.msra.mxu0 %v268
    %292 = vmatprep.subr.bf16.mxu0 0
    %293 = vmatpush1.bf16.msra.mxu0 %v269
    %294 = vmatprep.subr.bf16.mxu0 0
    %295 = vmatpush1.bf16.msra.mxu0 0
    %296 = vmatprep.subr.bf16.mxu0 0
    %297 = vmatpush1.bf16.msra.mxu0 0
    %298 = vmatprep.subr.bf16.mxu0 0
    %299 = vmatpush1.bf16.msra.mxu0 0
    %300 = vmatprep.subr.bf16.mxu0 0
    %301 = vmatpush1.bf16.msra.mxu0 0
    %302 = vmatprep.subr.bf16.mxu0 0
    %303 = vmatpush1.bf16.msra.mxu0 0
    %304 = vmatprep.subr.bf16.mxu0 0
    %305 = vmatpush1.bf16.msra.mxu0 0
    %306 = vmatprep.subr.bf16.mxu0 0
    %307 = vmatpush1.bf16.msra.mxu0 0
    %308 = vmatprep.subr.bf16.mxu0 0
    %309 = vmatpush1.bf16.msra.mxu0 0
    %310 = vmatprep.mubr.bf16.mxu0 0
    %311 = vmatmul.mubr.bf16.gmra.mrb[0].mxu0 %v208
    %v312 = vpop.f32.mrb[0].mxu0
    %v313 = vadd.f32 %v229, %v312
    %v314 = vpop.f32.mrb[0].mxu0
    %v315 = vpop.f32.mrb[0].mxu0
    %v316 = vpop.f32.mrb[0].mxu0
    %317 = vdwg.mxu0
    %318 = vst [vmem:[%s3] sm:$0xff] %v313
    // Predicated region
    $region18: #{critic_forward.1} parent=1 // pred_check
      _
    $region19: #{critic_forward.1} parent=1 // pred_check_branch
      %320 = sbr.rel (0) target = $region21
    $region20: #{critic_forward.1} parent=1 // pred_region
      _
    $region21: #{critic_forward.1} parent=1 // pred_fallthru
      _
    // Predicated region
    $region22: #{critic_forward.1} parent=1 // pred_check
      _
    $region23: #{critic_forward.1} parent=1 // pred_check_branch
      %322 = sbr.rel (0) target = $region25
    $region24: #{critic_forward.1} parent=1 // pred_region
      _
    $region25: #{critic_forward.1} parent=1 // pred_fallthru
      _
    %323 = vsyncpa [#allocation3], 1

</llo_original>
